<compile_context>
chip_gen: v6e
topology: v6e:2x2x1
jax: 0.10.0
libtpu: 0.0.40
codegen_flags: <defaults>
</compile_context>

<pallas_src>
import jax
import jax.numpy as jnp
from jax.experimental import pallas as pl
from jax.experimental.pallas import tpu as pltpu


# ------------------------------ fused forward --------------------------------
def net_forward(tokens, params):
    """tokens: (B, T) int -> (B*T, C) float32 log-probabilities."""
    B, T = tokens.shape
    emb_table = params["embedding"]                 # (V, E)
    V, E = emb_table.shape
    H = params["w_ih"].shape[0]
    C = params["w_fc"].shape[0]
    N = B * T

    # Host-side prep (free): pre-transpose weights, fold the two RNN biases.
    w_ih_t = params["w_ih"].T                       # (E, H)
    w_hh_t = params["w_hh"].T                       # (H, H)
    w_fc_t = params["w_fc"].T                       # (H, C)
    b_rnn = (params["b_ih"] + params["b_hh"]).reshape(1, H)
    b_fc = params["b_fc"].reshape(1, C)

    # Time-major flattened token ids: row n = t*B + b.
    tok_tm = tokens.T.reshape(N, 1).astype(jnp.int32)

    def kernel(tok_ref, emb_ref, wih_ref, whh_ref, brnn_ref, wfc_ref, bfc_ref,
               out_ref, h_all_ref):
        # 1) Embedding gather as a one-hot matmul (table stays in VMEM).
        tok = tok_ref[...]                                            # (N, 1) i32
        vocab_ids = jax.lax.broadcasted_iota(jnp.int32, (N, V), 1)    # (N, V)
        onehot = (tok == vocab_ids).astype(jnp.float32)               # (N, V)
        x = jnp.dot(onehot, emb_ref[...],
                    preferred_element_type=jnp.float32)               # (N, E)

        # 2) Input projection for all timesteps at once (hoisted out of the
        #    serial recurrence), both RNN biases folded in.
        xw = jnp.dot(x, wih_ref[...],
                     preferred_element_type=jnp.float32) + brnn_ref[...]   # (N, H)

        # 3) Sequential tanh recurrence, fully unrolled; hidden state carried
        #    in vregs.  Per-step hidden states land in a VMEM scratch slab.
        whh = whh_ref[...]                                            # (H, H)
        h = jnp.zeros((B, H), dtype=jnp.float32)
        for t in range(T):                                            # static unroll
            x_t = xw[t * B:(t + 1) * B, :]                            # (B, H)
            h = jnp.tanh(x_t + jnp.dot(h, whh,
                                       preferred_element_type=jnp.float32))
            h_all_ref[pl.ds(t * B, B), :] = h

        # 4) FC + log_softmax on the whole (N, H) slab, written once.
        logits = jnp.dot(h_all_ref[...], wfc_ref[...],
                         preferred_element_type=jnp.float32) + bfc_ref[...]
        m = jnp.max(logits, axis=-1, keepdims=True)
        shifted = logits - m
        lse = jnp.log(jnp.sum(jnp.exp(shifted), axis=-1, keepdims=True))
        out_ref[...] = (shifted - lse).astype(out_ref.dtype)

    out_tm = pl.pallas_call(
        kernel,
        out_shape=jax.ShapeDtypeStruct((N, C), jnp.float32),
        in_specs=[
            pl.BlockSpec((N, 1), lambda: (0, 0)),   # tokens (time-major)
            pl.BlockSpec((V, E), lambda: (0, 0)),   # embedding table
            pl.BlockSpec((E, H), lambda: (0, 0)),   # W_ih^T
            pl.BlockSpec((H, H), lambda: (0, 0)),   # W_hh^T
            pl.BlockSpec((1, H), lambda: (0, 0)),   # b_ih + b_hh
            pl.BlockSpec((H, C), lambda: (0, 0)),   # W_fc^T
            pl.BlockSpec((1, C), lambda: (0, 0)),   # b_fc
        ],
        out_specs=pl.BlockSpec((N, C), lambda: (0, 0)),
        scratch_shapes=[pltpu.VMEM((N, H), jnp.float32)],
    )(tok_tm, emb_table, w_ih_t, w_hh_t, b_rnn, w_fc_t, b_fc)

    # Reorder the tiny time-major (N, C) output (row = t*B + b) to PyTorch's
    # view(-1, H) row order (row = b*T + t).  128 floats — negligible.
    return jnp.transpose(out_tm.reshape(T, B, C), (1, 0, 2)).reshape(N, C)


# ------------------------------- reference ------------------------------------
def net_forward_ref(tokens, params):
    emb = params["embedding"][tokens]                       # (B, T, E)
    B, T, _ = emb.shape
    H = params["w_ih"].shape[0]

    def step(h, x_t):
        h_new = jnp.tanh(x_t @ params["w_ih"].T + params["b_ih"]
                         + h @ params["w_hh"].T + params["b_hh"])
        return h_new, h_new

    x_tbe = jnp.transpose(emb, (1, 0, 2))
    _, h_tbh = jax.lax.scan(step, jnp.zeros((B, H), jnp.float32), x_tbe)
    h_flat = jnp.transpose(h_tbh, (1, 0, 2)).reshape(-1, H)
    logits = h_flat @ params["w_fc"].T + params["b_fc"]
    return jax.nn.log_softmax(logits, axis=1)


if __name__ == "__main__":
    # Small hyperparameters consistent with the module's forward.
    VOCAB, E, H, C = 20, 32, 32, 8
    B, T = 2, 8

    key = jax.random.PRNGKey(0)
    keys = jax.random.split(key, 8)
    params = {
        "embedding": jax.random.normal(keys[0], (VOCAB, E), jnp.float32) * 0.1,
        "w_ih": jax.random.normal(keys[1], (H, E), jnp.float32) * 0.1,
        "w_hh": jax.random.normal(keys[2], (H, H), jnp.float32) * 0.1,
        "b_ih": jax.random.normal(keys[3], (H,), jnp.float32) * 0.1,
        "b_hh": jax.random.normal(keys[4], (H,), jnp.float32) * 0.1,
        "w_fc": jax.random.normal(keys[5], (C, H), jnp.float32) * 0.1,
        "b_fc": jax.random.normal(keys[6], (C,), jnp.float32) * 0.1,
    }
    tokens = jax.random.randint(keys[7], (B, T), 0, VOCAB, dtype=jnp.int32)

    net_fwd = jax.jit(net_forward)
    out = net_fwd(tokens, params)
    out = jax.block_until_ready(out)

    ref = net_forward_ref(tokens, params)
    assert out.shape == (B * T, C), out.shape
    assert jnp.allclose(out, ref, atol=1e-5, rtol=1e-5), "mismatch vs JAX reference"

    print("KERNEL_OK")
</pallas_src>

<mosaic_0001>
module attributes {stable_mosaic.version = 11 : i64} {
  func.func @kernel(%arg0: memref<16x1xi32, #tpu.memory_space<vmem>>, %arg1: memref<20x32xf32, #tpu.memory_space<vmem>>, %arg2: memref<32x32xf32, #tpu.memory_space<vmem>>, %arg3: memref<32x32xf32, #tpu.memory_space<vmem>>, %arg4: memref<1x32xf32, #tpu.memory_space<vmem>>, %arg5: memref<32x8xf32, #tpu.memory_space<vmem>>, %arg6: memref<1x8xf32, #tpu.memory_space<vmem>>, %arg7: memref<16x8xf32, #tpu.memory_space<vmem>>, %arg8: memref<16x32xf32, #tpu.memory_space<vmem>>) attributes {dimension_semantics = [], scalar_prefetch = 0 : i64, scratch_operands = 1 : i64, tpu.core_type = #tpu.core_type<tc>} {
    %c0 = arith.constant 0 : index
    %c0_0 = arith.constant 0 : index
    %0 = vector.load %arg0[%c0, %c0_0] : memref<16x1xi32, #tpu.memory_space<vmem>>, vector<16x1xi32>
    %1 = tpu.iota {dimensions = array<i32: 1>} : vector<16x20xi32>
    %2 = vector.broadcast %0 : vector<16x1xi32> to vector<16x20xi32>
    %3 = arith.cmpi eq, %2, %1 : vector<16x20xi32>
    %4 = arith.extui %3 : vector<16x20xi1> to vector<16x20xi32>
    %5 = arith.sitofp %4 : vector<16x20xi32> to vector<16x20xf32>
    %c0_1 = arith.constant 0 : index
    %c0_2 = arith.constant 0 : index
    %6 = vector.load %arg1[%c0_1, %c0_2] : memref<20x32xf32, #tpu.memory_space<vmem>>, vector<20x32xf32>
    %cst = arith.constant dense<0.000000e+00> : vector<16x32xf32>
    %7 = tpu.matmul %5, %6, %cst {dimension_numbers = #tpu.dot_dimension_numbers<[1], [0], [0], [1], [0, 0, 1, 1], [], []>} : vector<16x20xf32>, vector<20x32xf32>, vector<16x32xf32> -> vector<16x32xf32>
    %c0_3 = arith.constant 0 : index
    %c0_4 = arith.constant 0 : index
    %8 = vector.load %arg2[%c0_3, %c0_4] : memref<32x32xf32, #tpu.memory_space<vmem>>, vector<32x32xf32>
    %cst_5 = arith.constant dense<0.000000e+00> : vector<16x32xf32>
    %9 = tpu.matmul %7, %8, %cst_5 {dimension_numbers = #tpu.dot_dimension_numbers<[1], [0], [0], [1], [0, 0, 1, 1], [], []>} : vector<16x32xf32>, vector<32x32xf32>, vector<16x32xf32> -> vector<16x32xf32>
    %c0_6 = arith.constant 0 : index
    %c0_7 = arith.constant 0 : index
    %10 = vector.load %arg4[%c0_6, %c0_7] : memref<1x32xf32, #tpu.memory_space<vmem>>, vector<1x32xf32>
    %11 = vector.broadcast %10 : vector<1x32xf32> to vector<16x32xf32>
    %12 = arith.addf %9, %11 : vector<16x32xf32>
    %c0_8 = arith.constant 0 : index
    %c0_9 = arith.constant 0 : index
    %13 = vector.load %arg3[%c0_8, %c0_9] : memref<32x32xf32, #tpu.memory_space<vmem>>, vector<32x32xf32>
    %cst_10 = arith.constant 0.000000e+00 : f32
    %14 = vector.broadcast %cst_10 : f32 to vector<2x32xf32>
    %15 = vector.extract_strided_slice %12 {offsets = [0, 0], sizes = [2, 32], strides = [1, 1]} : vector<16x32xf32> to vector<2x32xf32>
    %cst_11 = arith.constant dense<0.000000e+00> : vector<2x32xf32>
    %16 = tpu.matmul %14, %13, %cst_11 {dimension_numbers = #tpu.dot_dimension_numbers<[1], [0], [0], [1], [0, 0, 1, 1], [], []>} : vector<2x32xf32>, vector<32x32xf32>, vector<2x32xf32> -> vector<2x32xf32>
    %17 = arith.addf %15, %16 : vector<2x32xf32>
    %18 = math.tanh %17 : vector<2x32xf32>
    %c0_12 = arith.constant 0 : index
    %c0_13 = arith.constant 0 : index
    %19 = vector.load %arg8[%c0_12, %c0_13] : memref<16x32xf32, #tpu.memory_space<vmem>>, vector<2x32xf32>
    tpu.vector_store %arg8[%c0_12, %c0_13], %18 {strides = array<i32>} : memref<16x32xf32, #tpu.memory_space<vmem>>, vector<2x32xf32>,
    %20 = vector.extract_strided_slice %12 {offsets = [2, 0], sizes = [2, 32], strides = [1, 1]} : vector<16x32xf32> to vector<2x32xf32>
    %cst_14 = arith.constant dense<0.000000e+00> : vector<2x32xf32>
    %21 = tpu.matmul %18, %13, %cst_14 {dimension_numbers = #tpu.dot_dimension_numbers<[1], [0], [0], [1], [0, 0, 1, 1], [], []>} : vector<2x32xf32>, vector<32x32xf32>, vector<2x32xf32> -> vector<2x32xf32>
    %22 = arith.addf %20, %21 : vector<2x32xf32>
    %23 = math.tanh %22 : vector<2x32xf32>
    %c2 = arith.constant 2 : index
    %c0_15 = arith.constant 0 : index
    %24 = vector.load %arg8[%c2, %c0_15] : memref<16x32xf32, #tpu.memory_space<vmem>>, vector<2x32xf32>
    tpu.vector_store %arg8[%c2, %c0_15], %23 {strides = array<i32>} : memref<16x32xf32, #tpu.memory_space<vmem>>, vector<2x32xf32>,
    %25 = vector.extract_strided_slice %12 {offsets = [4, 0], sizes = [2, 32], strides = [1, 1]} : vector<16x32xf32> to vector<2x32xf32>
    %cst_16 = arith.constant dense<0.000000e+00> : vector<2x32xf32>
    %26 = tpu.matmul %23, %13, %cst_16 {dimension_numbers = #tpu.dot_dimension_numbers<[1], [0], [0], [1], [0, 0, 1, 1], [], []>} : vector<2x32xf32>, vector<32x32xf32>, vector<2x32xf32> -> vector<2x32xf32>
    %27 = arith.addf %25, %26 : vector<2x32xf32>
    %28 = math.tanh %27 : vector<2x32xf32>
    %c4 = arith.constant 4 : index
    %c0_17 = arith.constant 0 : index
    %29 = vector.load %arg8[%c4, %c0_17] : memref<16x32xf32, #tpu.memory_space<vmem>>, vector<2x32xf32>
    tpu.vector_store %arg8[%c4, %c0_17], %28 {strides = array<i32>} : memref<16x32xf32, #tpu.memory_space<vmem>>, vector<2x32xf32>,
    %30 = vector.extract_strided_slice %12 {offsets = [6, 0], sizes = [2, 32], strides = [1, 1]} : vector<16x32xf32> to vector<2x32xf32>
    %cst_18 = arith.constant dense<0.000000e+00> : vector<2x32xf32>
    %31 = tpu.matmul %28, %13, %cst_18 {dimension_numbers = #tpu.dot_dimension_numbers<[1], [0], [0], [1], [0, 0, 1, 1], [], []>} : vector<2x32xf32>, vector<32x32xf32>, vector<2x32xf32> -> vector<2x32xf32>
    %32 = arith.addf %30, %31 : vector<2x32xf32>
    %33 = math.tanh %32 : vector<2x32xf32>
    %c6 = arith.constant 6 : index
    %c0_19 = arith.constant 0 : index
    %34 = vector.load %arg8[%c6, %c0_19] : memref<16x32xf32, #tpu.memory_space<vmem>>, vector<2x32xf32>
    tpu.vector_store %arg8[%c6, %c0_19], %33 {strides = array<i32>} : memref<16x32xf32, #tpu.memory_space<vmem>>, vector<2x32xf32>,
    %35 = vector.extract_strided_slice %12 {offsets = [8, 0], sizes = [2, 32], strides = [1, 1]} : vector<16x32xf32> to vector<2x32xf32>
    %cst_20 = arith.constant dense<0.000000e+00> : vector<2x32xf32>
    %36 = tpu.matmul %33, %13, %cst_20 {dimension_numbers = #tpu.dot_dimension_numbers<[1], [0], [0], [1], [0, 0, 1, 1], [], []>} : vector<2x32xf32>, vector<32x32xf32>, vector<2x32xf32> -> vector<2x32xf32>
    %37 = arith.addf %35, %36 : vector<2x32xf32>
    %38 = math.tanh %37 : vector<2x32xf32>
    %c8 = arith.constant 8 : index
    %c0_21 = arith.constant 0 : index
    %39 = vector.load %arg8[%c8, %c0_21] : memref<16x32xf32, #tpu.memory_space<vmem>>, vector<2x32xf32>
    tpu.vector_store %arg8[%c8, %c0_21], %38 {strides = array<i32>} : memref<16x32xf32, #tpu.memory_space<vmem>>, vector<2x32xf32>,
    %40 = vector.extract_strided_slice %12 {offsets = [10, 0], sizes = [2, 32], strides = [1, 1]} : vector<16x32xf32> to vector<2x32xf32>
    %cst_22 = arith.constant dense<0.000000e+00> : vector<2x32xf32>
    %41 = tpu.matmul %38, %13, %cst_22 {dimension_numbers = #tpu.dot_dimension_numbers<[1], [0], [0], [1], [0, 0, 1, 1], [], []>} : vector<2x32xf32>, vector<32x32xf32>, vector<2x32xf32> -> vector<2x32xf32>
    %42 = arith.addf %40, %41 : vector<2x32xf32>
    %43 = math.tanh %42 : vector<2x32xf32>
    %c10 = arith.constant 10 : index
    %c0_23 = arith.constant 0 : index
    %44 = vector.load %arg8[%c10, %c0_23] : memref<16x32xf32, #tpu.memory_space<vmem>>, vector<2x32xf32>
    tpu.vector_store %arg8[%c10, %c0_23], %43 {strides = array<i32>} : memref<16x32xf32, #tpu.memory_space<vmem>>, vector<2x32xf32>,
    %45 = vector.extract_strided_slice %12 {offsets = [12, 0], sizes = [2, 32], strides = [1, 1]} : vector<16x32xf32> to vector<2x32xf32>
    %cst_24 = arith.constant dense<0.000000e+00> : vector<2x32xf32>
    %46 = tpu.matmul %43, %13, %cst_24 {dimension_numbers = #tpu.dot_dimension_numbers<[1], [0], [0], [1], [0, 0, 1, 1], [], []>} : vector<2x32xf32>, vector<32x32xf32>, vector<2x32xf32> -> vector<2x32xf32>
    %47 = arith.addf %45, %46 : vector<2x32xf32>
    %48 = math.tanh %47 : vector<2x32xf32>
    %c12 = arith.constant 12 : index
    %c0_25 = arith.constant 0 : index
    %49 = vector.load %arg8[%c12, %c0_25] : memref<16x32xf32, #tpu.memory_space<vmem>>, vector<2x32xf32>
    tpu.vector_store %arg8[%c12, %c0_25], %48 {strides = array<i32>} : memref<16x32xf32, #tpu.memory_space<vmem>>, vector<2x32xf32>,
    %50 = vector.extract_strided_slice %12 {offsets = [14, 0], sizes = [2, 32], strides = [1, 1]} : vector<16x32xf32> to vector<2x32xf32>
    %cst_26 = arith.constant dense<0.000000e+00> : vector<2x32xf32>
    %51 = tpu.matmul %48, %13, %cst_26 {dimension_numbers = #tpu.dot_dimension_numbers<[1], [0], [0], [1], [0, 0, 1, 1], [], []>} : vector<2x32xf32>, vector<32x32xf32>, vector<2x32xf32> -> vector<2x32xf32>
    %52 = arith.addf %50, %51 : vector<2x32xf32>
    %53 = math.tanh %52 : vector<2x32xf32>
    %c14 = arith.constant 14 : index
    %c0_27 = arith.constant 0 : index
    %54 = vector.load %arg8[%c14, %c0_27] : memref<16x32xf32, #tpu.memory_space<vmem>>, vector<2x32xf32>
    tpu.vector_store %arg8[%c14, %c0_27], %53 {strides = array<i32>} : memref<16x32xf32, #tpu.memory_space<vmem>>, vector<2x32xf32>,
    %c0_28 = arith.constant 0 : index
    %c0_29 = arith.constant 0 : index
    %55 = vector.load %arg8[%c0_28, %c0_29] : memref<16x32xf32, #tpu.memory_space<vmem>>, vector<16x32xf32>
    %c0_30 = arith.constant 0 : index
    %c0_31 = arith.constant 0 : index
    %56 = vector.load %arg5[%c0_30, %c0_31] : memref<32x8xf32, #tpu.memory_space<vmem>>, vector<32x8xf32>
    %cst_32 = arith.constant dense<0.000000e+00> : vector<16x8xf32>
    %57 = tpu.matmul %55, %56, %cst_32 {dimension_numbers = #tpu.dot_dimension_numbers<[1], [0], [0], [1], [0, 0, 1, 1], [], []>} : vector<16x32xf32>, vector<32x8xf32>, vector<16x8xf32> -> vector<16x8xf32>
    %c0_33 = arith.constant 0 : index
    %c0_34 = arith.constant 0 : index
    %58 = vector.load %arg6[%c0_33, %c0_34] : memref<1x8xf32, #tpu.memory_space<vmem>>, vector<1x8xf32>
    %59 = vector.broadcast %58 : vector<1x8xf32> to vector<16x8xf32>
    %60 = arith.addf %57, %59 : vector<16x8xf32>
    %cst_35 = arith.constant dense<0xFF800000> : vector<16xf32>
    %61 = vector.multi_reduction <maximumf>, %60, %cst_35 [1] : vector<16x8xf32> to vector<16xf32>
    %62 = vector.shape_cast %61 : vector<16xf32> to vector<16x1xf32>
    %63 = vector.broadcast %62 : vector<16x1xf32> to vector<16x8xf32>
    %64 = arith.subf %60, %63 : vector<16x8xf32>
    %65 = math.exp %64 : vector<16x8xf32>
    %cst_36 = arith.constant dense<0.000000e+00> : vector<16xf32>
    %66 = vector.multi_reduction <add>, %65, %cst_36 [1] : vector<16x8xf32> to vector<16xf32>
    %67 = vector.shape_cast %66 : vector<16xf32> to vector<16x1xf32>
    %68 = math.log %67 : vector<16x1xf32>
    %69 = vector.broadcast %68 : vector<16x1xf32> to vector<16x8xf32>
    %70 = arith.subf %64, %69 : vector<16x8xf32>
    %c0_37 = arith.constant 0 : index
    %c0_38 = arith.constant 0 : index
    %71 = vector.load %arg7[%c0_37, %c0_38] : memref<16x8xf32, #tpu.memory_space<vmem>>, vector<16x8xf32>
    tpu.vector_store %arg7[%c0_37, %c0_38], %70 {strides = array<i32>} : memref<16x8xf32, #tpu.memory_space<vmem>>, vector<16x8xf32>,
    return
  }
}

</mosaic_0001>

<llo_original>
// kernel: net_forward.1
$region0: #{net_forward.1}
  #allocation0 [shape = 'u32[]', space=smem, size = 0x4, offset = 0x4, fixed_abs, tag = 'smem constant byte address 0x4 - core index']
  #allocation1 [shape = 'u32[144,128]{1,0:T(1,128)}', space=vmem, size = 0x12000, scoped, tag = 'internal scratch']
  #allocation2 [shape = 'f32[16,32]{1,0:T(8,128)}', space=vmem, size = 0x2000, scoped, tag = 'scratch operand']
  %s0 = inlined_call_operand.vmem [shape: s32[16,1], index: 0, kind: input, shape index: {}]
  %s1 = inlined_call_operand.vmem [shape: f32[20,32], index: 1, kind: input, shape index: {}]
  %s2 = inlined_call_operand.vmem [shape: f32[32,32], index: 2, kind: input, shape index: {}]
  %s3 = inlined_call_operand.vmem [shape: f32[32,32], index: 3, kind: input, shape index: {}]
  %s4 = inlined_call_operand.vmem [shape: f32[1,32], index: 4, kind: input, shape index: {}]
  %s5 = inlined_call_operand.vmem [shape: f32[32,8], index: 5, kind: input, shape index: {}]
  %s6 = inlined_call_operand.vmem [shape: f32[1,8], index: 6, kind: input, shape index: {}]
  %s7 = inlined_call_operand.vmem [shape: f32[16,8], index: 7, kind: output, shape index: {}]
  %s8 = sld [smem:[#allocation0]]
  $region38: #{net_forward.1} parent=0
    _
  %s10 = ssub.s32 1, %s8
  %s11 = scalar_select 0, %s10, %s8
  // Predicated region
  $region2: #{net_forward.1} parent=0 // pred_check
    _
  $region3: #{net_forward.1} parent=0 // pred_check_branch
    %13 = sbr.rel (0) target = $region5
  $region4: #{net_forward.1} parent=0 // pred_region
    _
  $region5: #{net_forward.1} parent=0 // pred_fallthru
    _
  // Predicated region
  $region6: #{net_forward.1} parent=0 // pred_check
    _
  $region7: #{net_forward.1} parent=0 // pred_check_branch
    %15 = sbr.rel (0) target = $region9
  $region8: #{net_forward.1} parent=0 // pred_region
    _
  $region9: #{net_forward.1} parent=0 // pred_fallthru
    _
  // Predicated region
  $region10: #{net_forward.1} parent=0 // pred_check
    _
  $region11: #{net_forward.1} parent=0 // pred_check_branch
    %17 = sbr.rel (0) target = $region13
  $region12: #{net_forward.1} parent=0 // pred_region
    _
  $region13: #{net_forward.1} parent=0 // pred_fallthru
    _
  // Predicated region
  $region14: #{net_forward.1} parent=0 // pred_check
    _
  $region15: #{net_forward.1} parent=0 // pred_check_branch
    %19 = sbr.rel (0) target = $region17
  $region16: #{net_forward.1} parent=0 // pred_region
    _
  $region17: #{net_forward.1} parent=0 // pred_fallthru
    _
  // Predicated region
  $region18: #{net_forward.1} parent=0 // pred_check
    _
  $region19: #{net_forward.1} parent=0 // pred_check_branch
    %21 = sbr.rel (0) target = $region21
  $region20: #{net_forward.1} parent=0 // pred_region
    _
  $region21: #{net_forward.1} parent=0 // pred_fallthru
    _
  // Predicated region
  $region22: #{net_forward.1} parent=0 // pred_check
    _
  $region23: #{net_forward.1} parent=0 // pred_check_branch
    %23 = sbr.rel (0) target = $region25
  $region24: #{net_forward.1} parent=0 // pred_region
    _
  $region25: #{net_forward.1} parent=0 // pred_fallthru
    _
  // Predicated region
  $region26: #{net_forward.1} parent=0 // pred_check
    _
  $region27: #{net_forward.1} parent=0 // pred_check_branch
    %25 = sbr.rel (0) target = $region29
  $region28: #{net_forward.1} parent=0 // pred_region
    _
  $region29: #{net_forward.1} parent=0 // pred_fallthru
    _
  %v26 = vld [vmem:[%s0] sm:$0xff]
  %v27 = vld [vmem:[%s0 + $0x8] sm:$0xff]
  %v28 = vlaneseq
  %v29 = vand.u32 %v28, 127
  %30 = vset.pattern.permute.xlu0 0
  %31 = vperm.xlu0 %30, %v26
  %v32 = vpop.permute.xlu0 %31
  %33 = vset.pattern.permute.xlu0 0
  %34 = vperm.xlu0 %33, %v27
  %v35 = vpop.permute.xlu0 %34
  %vm36 = vcmp.eq.s32.totalorder %v32, %v29
  %vm37 = vcmp.eq.s32.totalorder %v35, %v29
  %v38 = vsel %vm36, 1, 0
  %v39 = vsel %vm37, 1, 0
  %v40 = vcvt.s32.f32 %v38
  %v41 = vcvt.s32.f32 %v39
  %v42 = vld [vmem:[%s1] sm:$0xff]
  %v43 = vld [vmem:[%s1 + $0x8] sm:$0xff]
  %v44 = vld [vmem:[%s1 + $0x10] sm:$0xf]
  %vm45 = vcmask 162816
  %v47 = vsel %vm45, %v40, 0
  %v50 = vsel %vm45, %v41, 0
  %vm52 = vcmask 1043456
  %v54 = vsel %vm52, %v44, 0
  %56 = vmatprep.subr.mxu0 0.0
  %57 = vmatpush1.msra.mxu0 0.0
  %58 = vmatprep.subr.mxu0 0.0
  %59 = vmatpush1.msra.mxu0 0.0
  %60 = vmatprep.subr.mxu0 0.0
  %61 = vmatpush1.msra.mxu0 0.0
  %62 = vmatprep.subr.mxu0 0.0
  %63 = vmatpush1.msra.mxu0 0.0
  %64 = vmatprep.subr.mxu0 0.0
  %65 = vmatpush1.msra.mxu0 0.0
  %66 = vmatprep.subr.mxu0 0.0
  %67 = vmatpush1.msra.mxu0 0.0
  %68 = vmatprep.subr.mxu0 0.0
  %69 = vmatpush1.msra.mxu0 0.0
  %70 = vmatprep.subr.mxu0 0.0
  %71 = vmatpush1.msra.mxu0 0.0
  %72 = vmatprep.subr.mxu0 0.0
  %73 = vmatpush1.msra.mxu0 0.0
  %74 = vmatprep.subr.mxu0 0.0
  %75 = vmatpush1.msra.mxu0 0.0
  %76 = vmatprep.subr.mxu0 0.0
  %77 = vmatpush1.msra.mxu0 0.0
  %78 = vmatprep.subr.mxu0 0.0
  %79 = vmatpush1.msra.mxu0 0.0
  %80 = vmatprep.subr.mxu0 0.0
  %81 = vmatpush1.msra.mxu0 0.0
  %82 = vmatprep.subr.mxu0 0.0
  %83 = vmatpush1.msra.mxu0 %v54
  %84 = vmatprep.subr.mxu0 0.0
  %85 = vmatpush1.msra.mxu0 %v43
  %86 = vmatprep.subr.mxu0 0.0
  %87 = vmatpush1.msra.mxu0 %v42
  %88 = vmatprep.subr.mxu0 0.0
  %89 = vmatpush2.msra.mxu0 0.0
  %90 = vmatprep.subr.mxu0 0.0
  %91 = vmatpush2.msra.mxu0 0.0
  %92 = vmatprep.subr.mxu0 0.0
  %93 = vmatpush2.msra.mxu0 0.0
  %94 = vmatprep.subr.mxu0 0.0
  %95 = vmatpush2.msra.mxu0 0.0
  %96 = vmatprep.subr.mxu0 0.0
  %97 = vmatpush2.msra.mxu0 0.0
  %98 = vmatprep.subr.mxu0 0.0
  %99 = vmatpush2.msra.mxu0 0.0
  %100 = vmatprep.subr.mxu0 0.0
  %101 = vmatpush2.msra.mxu0 0.0
  %102 = vmatprep.subr.mxu0 0.0
  %103 = vmatpush2.msra.mxu0 0.0
  %104 = vmatprep.subr.mxu0 0.0
  %105 = vmatpush2.msra.mxu0 0.0
  %106 = vmatprep.subr.mxu0 0.0
  %107 = vmatpush2.msra.mxu0 0.0
  %108 = vmatprep.subr.mxu0 0.0
  %109 = vmatpush2.msra.mxu0 0.0
  %110 = vmatprep.subr.mxu0 0.0
  %111 = vmatpush2.msra.mxu0 0.0
  %112 = vmatprep.subr.mxu0 0.0
  %113 = vmatpush2.msra.mxu0 0.0
  %114 = vmatprep.subr.mxu0 0.0
  %115 = vmatpush2.msra.mxu0 0.0
  %116 = vmatprep.subr.mxu0 0.0
  %117 = vmatpush2.msra.mxu0 0.0
  %118 = vmatprep.subr.mxu0 0.0
  %119 = vmatpush2.msra.mxu0 0.0
  %120 = vmatprep.mubr.f32.mxu0 0.0
  %121 = vmatmul.mubr.f32.gmra.mxu0 %v47
  %v122 = vpop.f32.mrf.mxu0
  %v123 = vadd.f32 0.0, %v122
  %v124 = vpop.f32.mrf.mxu0
  %125 = vmatprep.mubr.f32.mxu0 0.0
  %126 = vmatmul.mubr.f32.gmra.mxu0 %v50
  %v127 = vpop.f32.mrf.mxu0
  %v128 = vadd.f32 0.0, %v127
  %v129 = vpop.f32.mrf.mxu0
  %130 = vdwg.mxu0
  %v131 = vld [vmem:[%s2] sm:$0xff]
  %v132 = vld [vmem:[%s2 + $0x8] sm:$0xff]
  %v133 = vld [vmem:[%s2 + $0x10] sm:$0xff]
  %v134 = vld [vmem:[%s2 + $0x18] sm:$0xff]
  %v135 = vld [vmem:[%s4] sm:$0x1]
  %v137 = vlaneseq
  %v138 = vshrl.u32 %v137, 7
  %v139 = vsub.s32 0, %v138
  %v140 = vrot.slane %v135, %v139
  %vm142 = vcmask 261120
  %v144 = vsel %vm142, %v123, 0
  %v147 = vsel %vm142, %v128, 0
  %149 = vmatprep.subr.mxu0 0.0
  %150 = vmatpush1.msra.mxu0 0.0
  %151 = vmatprep.subr.mxu0 0.0
  %152 = vmatpush1.msra.mxu0 0.0
  %153 = vmatprep.subr.mxu0 0.0
  %154 = vmatpush1.msra.mxu0 0.0
  %155 = vmatprep.subr.mxu0 0.0
  %156 = vmatpush1.msra.mxu0 0.0
  %157 = vmatprep.subr.mxu0 0.0
  %158 = vmatpush1.msra.mxu0 0.0
  %159 = vmatprep.subr.mxu0 0.0
  %160 = vmatpush1.msra.mxu0 0.0
  %161 = vmatprep.subr.mxu0 0.0
  %162 = vmatpush1.msra.mxu0 0.0
  %163 = vmatprep.subr.mxu0 0.0
  %164 = vmatpush1.msra.mxu0 0.0
  %165 = vmatprep.subr.mxu0 0.0
  %166 = vmatpush1.msra.mxu0 0.0
  %167 = vmatprep.subr.mxu0 0.0
  %168 = vmatpush1.msra.mxu0 0.0
  %169 = vmatprep.subr.mxu0 0.0
  %170 = vmatpush1.msra.mxu0 0.0
  %171 = vmatprep.subr.mxu0 0.0
  %172 = vmatpush1.msra.mxu0 0.0
  %173 = vmatprep.subr.mxu0 0.0
  %174 = vmatpush1.msra.mxu0 %v134
  %175 = vmatprep.subr.mxu0 0.0
  %176 = vmatpush1.msra.mxu0 %v133
  %177 = vmatprep.subr.mxu0 0.0
  %178 = vmatpush1.msra.mxu0 %v132
  %179 = vmatprep.subr.mxu0 0.0
  %180 = vmatpush1.msra.mxu0 %v131
  %181 = vmatprep.subr.mxu0 0.0
  %182 = vmatpush2.msra.mxu0 0.0
  %183 = vmatprep.subr.mxu0 0.0
  %184 = vmatpush2.msra.mxu0 0.0
  %185 = vmatprep.subr.mxu0 0.0
  %186 = vmatpush2.msra.mxu0 0.0
  %187 = vmatprep.subr.mxu0 0.0
  %188 = vmatpush2.msra.mxu0 0.0
  %189 = vmatprep.subr.mxu0 0.0
  %190 = vmatpush2.msra.mxu0 0.0
  %191 = vmatprep.subr.mxu0 0.0
  %192 = vmatpush2.msra.mxu0 0.0
  %193 = vmatprep.subr.mxu0 0.0
  %194 = vmatpush2.msra.mxu0 0.0
  %195 = vmatprep.subr.mxu0 0.0
  %196 = vmatpush2.msra.mxu0 0.0
  %197 = vmatprep.subr.mxu0 0.0
  %198 = vmatpush2.msra.mxu0 0.0
  %199 = vmatprep.subr.mxu0 0.0
  %200 = vmatpush2.msra.mxu0 0.0
  %201 = vmatprep.subr.mxu0 0.0
  %202 = vmatpush2.msra.mxu0 0.0
  %203 = vmatprep.subr.mxu0 0.0
  %204 = vmatpush2.msra.mxu0 0.0
  %205 = vmatprep.subr.mxu0 0.0
  %206 = vmatpush2.msra.mxu0 0.0
  %207 = vmatprep.subr.mxu0 0.0
  %208 = vmatpush2.msra.mxu0 0.0
  %209 = vmatprep.subr.mxu0 0.0
  %210 = vmatpush2.msra.mxu0 0.0
  %211 = vmatprep.subr.mxu0 0.0
  %212 = vmatpush2.msra.mxu0 0.0
  %213 = vmatprep.mubr.f32.mxu0 0.0
  %214 = vmatmul.mubr.f32.gmra.mxu0 %v144
  %v215 = vpop.f32.mrf.mxu0
  %v216 = vadd.f32 %v140, %v215
  %v217 = vpop.f32.mrf.mxu0
  %218 = vmatprep.mubr.f32.mxu0 0.0
  %219 = vmatmul.mubr.f32.gmra.mxu0 %v147
  %v220 = vpop.f32.mrf.mxu0
  %v221 = vadd.f32 %v140, %v220
  %v222 = vpop.f32.mrf.mxu0
  %223 = vdwg.mxu0
  %v224 = vld [vmem:[%s3] sm:$0xff]
  %v225 = vld [vmem:[%s3 + $0x8] sm:$0xff]
  %v226 = vld [vmem:[%s3 + $0x10] sm:$0xff]
  %v227 = vld [vmem:[%s3 + $0x18] sm:$0xff]
  %v229 = vsel %vm142, 0.0, 0
  %231 = vmatprep.subr.mxu0 0.0
  %232 = vmatpush1.msra.mxu0 0.0
  %233 = vmatprep.subr.mxu0 0.0
  %234 = vmatpush1.msra.mxu0 0.0
  %235 = vmatprep.subr.mxu0 0.0
  %236 = vmatpush1.msra.mxu0 0.0
  %237 = vmatprep.subr.mxu0 0.0
  %238 = vmatpush1.msra.mxu0 0.0
  %239 = vmatprep.subr.mxu0 0.0
  %240 = vmatpush1.msra.mxu0 0.0
  %241 = vmatprep.subr.mxu0 0.0
  %242 = vmatpush1.msra.mxu0 0.0
  %243 = vmatprep.subr.mxu0 0.0
  %244 = vmatpush1.msra.mxu0 0.0
  %245 = vmatprep.subr.mxu0 0.0
  %246 = vmatpush1.msra.mxu0 0.0
  %247 = vmatprep.subr.mxu0 0.0
  %248 = vmatpush1.msra.mxu0 0.0
  %249 = vmatprep.subr.mxu0 0.0
  %250 = vmatpush1.msra.mxu0 0.0
  %251 = vmatprep.subr.mxu0 0.0
  %252 = vmatpush1.msra.mxu0 0.0
  %253 = vmatprep.subr.mxu0 0.0
  %254 = vmatpush1.msra.mxu0 0.0
  %255 = vmatprep.subr.mxu0 0.0
  %256 = vmatpush1.msra.mxu0 %v227
  %257 = vmatprep.subr.mxu0 0.0
  %258 = vmatpush1.msra.mxu0 %v226
  %259 = vmatprep.subr.mxu0 0.0
  %260 = vmatpush1.msra.mxu0 %v225
  %261 = vmatprep.subr.mxu0 0.0
  %262 = vmatpush1.msra.mxu0 %v224
  %263 = vmatprep.subr.mxu0 0.0
  %264 = vmatpush2.msra.mxu0 0.0
  %265 = vmatprep.subr.mxu0 0.0
  %266 = vmatpush2.msra.mxu0 0.0
  %267 = vmatprep.subr.mxu0 0.0
  %268 = vmatpush2.msra.mxu0 0.0
  %269 = vmatprep.subr.mxu0 0.0
  %270 = vmatpush2.msra.mxu0 0.0
  %271 = vmatprep.subr.mxu0 0.0
  %272 = vmatpush2.msra.mxu0 0.0
  %273 = vmatprep.subr.mxu0 0.0
  %274 = vmatpush2.msra.mxu0 0.0
  %275 = vmatprep.subr.mxu0 0.0
  %276 = vmatpush2.msra.mxu0 0.0
  %277 = vmatprep.subr.mxu0 0.0
  %278 = vmatpush2.msra.mxu0 0.0
  %279 = vmatprep.subr.mxu0 0.0
  %280 = vmatpush2.msra.mxu0 0.0
  %281 = vmatprep.subr.mxu0 0.0
  %282 = vmatpush2.msra.mxu0 0.0
  %283 = vmatprep.subr.mxu0 0.0
  %284 = vmatpush2.msra.mxu0 0.0
  %285 = vmatprep.subr.mxu0 0.0
  %286 = vmatpush2.msra.mxu0 0.0
  %287 = vmatprep.subr.mxu0 0.0
  %288 = vmatpush2.msra.mxu0 0.0
  %289 = vmatprep.subr.mxu0 0.0
  %290 = vmatpush2.msra.mxu0 0.0
  %291 = vmatprep.subr.mxu0 0.0
  %292 = vmatpush2.msra.mxu0 0.0
  %293 = vmatprep.subr.mxu0 0.0
  %294 = vmatpush2.msra.mxu0 0.0
  %295 = vmatprep.mubr.f32.mxu0 0.0
  %296 = vmatmul.mubr.f32.gmra.mxu0 %v229
  %v297 = vpop.f32.mrf.mxu0
  %v298 = vadd.f32 0.0, %v297
  %v299 = vpop.f32.mrf.mxu0
  %300 = vdwg.mxu0
  %v301 = vadd.f32 %v216, %v298
  %v302 = vtanh.pop %v301
  %vm303 = vcmask 254976
  %304 = vst.msk [vmem:[#allocation2] sm:$0x3] %vm303, %v302
  %v306 = vsel %vm142, %v302, 0
  %308 = vmatprep.subr.mxu0 0.0
  %309 = vmatpush1.msra.mxu0 0.0
  %310 = vmatprep.subr.mxu0 0.0
  %311 = vmatpush1.msra.mxu0 0.0
  %312 = vmatprep.subr.mxu0 0.0
  %313 = vmatpush1.msra.mxu0 0.0
  %314 = vmatprep.subr.mxu0 0.0
  %315 = vmatpush1.msra.mxu0 0.0
  %316 = vmatprep.subr.mxu0 0.0
  %317 = vmatpush1.msra.mxu0 0.0
  %318 = vmatprep.subr.mxu0 0.0
  %319 = vmatpush1.msra.mxu0 0.0
  %320 = vmatprep.subr.mxu0 0.0
  %321 = vmatpush1.msra.mxu0 0.0
  %322 = vmatprep.subr.mxu0 0.0
  %323 = vmatpush1.msra.mxu0 0.0
  %324 = vmatprep.subr.mxu0 0.0
  %325 = vmatpush1.msra.mxu0 0.0
  %326 = vmatprep.subr.mxu0 0.0
  %327 = vmatpush1.msra.mxu0 0.0
  %328 = vmatprep.subr.mxu0 0.0
  %329 = vmatpush1.msra.mxu0 0.0
  %330 = vmatprep.subr.mxu0 0.0
  %331 = vmatpush1.msra.mxu0 0.0
  %332 = vmatprep.subr.mxu0 0.0
  %333 = vmatpush1.msra.mxu0 %v227
  %334 = vmatprep.subr.mxu0 0.0
  %335 = vmatpush1.msra.mxu0 %v226
  %336 = vmatprep.subr.mxu0 0.0
  %337 = vmatpush1.msra.mxu0 %v225
  %338 = vmatprep.subr.mxu0 0.0
  %339 = vmatpush1.msra.mxu0 %v224
  %340 = vmatprep.subr.mxu0 0.0
  %341 = vmatpush2.msra.mxu0 0.0
  %342 = vmatprep.subr.mxu0 0.0
  %343 = vmatpush2.msra.mxu0 0.0
  %344 = vmatprep.subr.mxu0 0.0
  %345 = vmatpush2.msra.mxu0 0.0
  %346 = vmatprep.subr.mxu0 0.0
  %347 = vmatpush2.msra.mxu0 0.0
  %348 = vmatprep.subr.mxu0 0.0
  %349 = vmatpush2.msra.mxu0 0.0
  %350 = vmatprep.subr.mxu0 0.0
  %351 = vmatpush2.msra.mxu0 0.0
  %352 = vmatprep.subr.mxu0 0.0
  %353 = vmatpush2.msra.mxu0 0.0
  %354 = vmatprep.subr.mxu0 0.0
  %355 = vmatpush2.msra.mxu0 0.0
  %356 = vmatprep.subr.mxu0 0.0
  %357 = vmatpush2.msra.mxu0 0.0
  %358 = vmatprep.subr.mxu0 0.0
  %359 = vmatpush2.msra.mxu0 0.0
  %360 = vmatprep.subr.mxu0 0.0
  %361 = vmatpush2.msra.mxu0 0.0
  %362 = vmatprep.subr.mxu0 0.0
  %363 = vmatpush2.msra.mxu0 0.0
  %364 = vmatprep.subr.mxu0 0.0
  %365 = vmatpush2.msra.mxu0 0.0
  %366 = vmatprep.subr.mxu0 0.0
  %367 = vmatpush2.msra.mxu0 0.0
  %368 = vmatprep.subr.mxu0 0.0
  %369 = vmatpush2.msra.mxu0 0.0
  %370 = vmatprep.subr.mxu0 0.0
  %371 = vmatpush2.msra.mxu0 0.0
  %372 = vmatprep.mubr.f32.mxu0 0.0
  %373 = vmatmul.mubr.f32.gmra.mxu0 %v306
  %v374 = vpop.f32.mrf.mxu0
  %v375 = vadd.f32 0.0, %v374
  %v376 = vpop.f32.mrf.mxu0
  %377 = vdwg.mxu0
  %v379 = vrot.slane %v375, 6
  %v381 = vadd.f32 %v216, %v379
  %v382 = vtanh.pop %v381
  %vm383 = vcmask 257026
  %384 = vst.msk [vmem:[#allocation2] sm:$0xc] %vm383, %v382
  %v386 = vrot.slane %v382, 2
  %v387 = vsel %vm142, %v386, 0
  %389 = vmatprep.subr.mxu0 0.0
  %390 = vmatpush1.msra.mxu0 0.0
  %391 = vmatprep.subr.mxu0 0.0
  %392 = vmatpush1.msra.mxu0 0.0
  %393 = vmatprep.subr.mxu0 0.0
  %394 = vmatpush1.msra.mxu0 0.0
  %395 = vmatprep.subr.mxu0 0.0
  %396 = vmatpush1.msra.mxu0 0.0
  %397 = vmatprep.subr.mxu0 0.0
  %398 = vmatpush1.msra.mxu0 0.0
  %399 = vmatprep.subr.mxu0 0.0
  %400 = vmatpush1.msra.mxu0 0.0
  %401 = vmatprep.subr.mxu0 0.0
  %402 = vmatpush1.msra.mxu0 0.0
  %403 = vmatprep.subr.mxu0 0.0
  %404 = vmatpush1.msra.mxu0 0.0
  %405 = vmatprep.subr.mxu0 0.0
  %406 = vmatpush1.msra.mxu0 0.0
  %407 = vmatprep.subr.mxu0 0.0
  %408 = vmatpush1.msra.mxu0 0.0
  %409 = vmatprep.subr.mxu0 0.0
  %410 = vmatpush1.msra.mxu0 0.0
  %411 = vmatprep.subr.mxu0 0.0
  %412 = vmatpush1.msra.mxu0 0.0
  %413 = vmatprep.subr.mxu0 0.0
  %414 = vmatpush1.msra.mxu0 %v227
  %415 = vmatprep.subr.mxu0 0.0
  %416 = vmatpush1.msra.mxu0 %v226
  %417 = vmatprep.subr.mxu0 0.0
  %418 = vmatpush1.msra.mxu0 %v225
  %419 = vmatprep.subr.mxu0 0.0
  %420 = vmatpush1.msra.mxu0 %v224
  %421 = vmatprep.subr.mxu0 0.0
  %422 = vmatpush2.msra.mxu0 0.0
  %423 = vmatprep.subr.mxu0 0.0
  %424 = vmatpush2.msra.mxu0 0.0
  %425 = vmatprep.subr.mxu0 0.0
  %426 = vmatpush2.msra.mxu0 0.0
  %427 = vmatprep.subr.mxu0 0.0
  %428 = vmatpush2.msra.mxu0 0.0
  %429 = vmatprep.subr.mxu0 0.0
  %430 = vmatpush2.msra.mxu0 0.0
  %431 = vmatprep.subr.mxu0 0.0
  %432 = vmatpush2.msra.mxu0 0.0
  %433 = vmatprep.subr.mxu0 0.0
  %434 = vmatpush2.msra.mxu0 0.0
  %435 = vmatprep.subr.mxu0 0.0
  %436 = vmatpush2.msra.mxu0 0.0
  %437 = vmatprep.subr.mxu0 0.0
  %438 = vmatpush2.msra.mxu0 0.0
  %439 = vmatprep.subr.mxu0 0.0
  %440 = vmatpush2.msra.mxu0 0.0
  %441 = vmatprep.subr.mxu0 0.0
  %442 = vmatpush2.msra.mxu0 0.0
  %443 = vmatprep.subr.mxu0 0.0
  %444 = vmatpush2.msra.mxu0 0.0
  %445 = vmatprep.subr.mxu0 0.0
  %446 = vmatpush2.msra.mxu0 0.0
  %447 = vmatprep.subr.mxu0 0.0
  %448 = vmatpush2.msra.mxu0 0.0
  %449 = vmatprep.subr.mxu0 0.0
  %450 = vmatpush2.msra.mxu0 0.0
  %451 = vmatprep.subr.mxu0 0.0
  %452 = vmatpush2.msra.mxu0 0.0
  %453 = vmatprep.mubr.f32.mxu0 0.0
  %454 = vmatmul.mubr.f32.gmra.mxu0 %v387
  %v455 = vpop.f32.mrf.mxu0
  %v456 = vadd.f32 0.0, %v455
  %v457 = vpop.f32.mrf.mxu0
  %458 = vdwg.mxu0
  %v460 = vrot.slane %v456, 4
  %v462 = vadd.f32 %v216, %v460
  %v463 = vtanh.pop %v462
  %vm464 = vcmask 259076
  %465 = vst.msk [vmem:[#allocation2] sm:$0x30] %vm464, %v463
  %v467 = vrot.slane %v463, 4
  %v468 = vsel %vm142, %v467, 0
  %470 = vmatprep.subr.mxu0 0.0
  %471 = vmatpush1.msra.mxu0 0.0
  %472 = vmatprep.subr.mxu0 0.0
  %473 = vmatpush1.msra.mxu0 0.0
  %474 = vmatprep.subr.mxu0 0.0
  %475 = vmatpush1.msra.mxu0 0.0
  %476 = vmatprep.subr.mxu0 0.0
  %477 = vmatpush1.msra.mxu0 0.0
  %478 = vmatprep.subr.mxu0 0.0
  %479 = vmatpush1.msra.mxu0 0.0
  %480 = vmatprep.subr.mxu0 0.0
  %481 = vmatpush1.msra.mxu0 0.0
  %482 = vmatprep.subr.mxu0 0.0
  %483 = vmatpush1.msra.mxu0 0.0
  %484 = vmatprep.subr.mxu0 0.0
  %485 = vmatpush1.msra.mxu0 0.0
  %486 = vmatprep.subr.mxu0 0.0
  %487 = vmatpush1.msra.mxu0 0.0
  %488 = vmatprep.subr.mxu0 0.0
  %489 = vmatpush1.msra.mxu0 0.0
  %490 = vmatprep.subr.mxu0 0.0
  %491 = vmatpush1.msra.mxu0 0.0
  %492 = vmatprep.subr.mxu0 0.0
  %493 = vmatpush1.msra.mxu0 0.0
  %494 = vmatprep.subr.mxu0 0.0
  %495 = vmatpush1.msra.mxu0 %v227
  %496 = vmatprep.subr.mxu0 0.0
  %497 = vmatpush1.msra.mxu0 %v226
  %498 = vmatprep.subr.mxu0 0.0
  %499 = vmatpush1.msra.mxu0 %v225
  %500 = vmatprep.subr.mxu0 0.0
  %501 = vmatpush1.msra.mxu0 %v224
  %502 = vmatprep.subr.mxu0 0.0
  %503 = vmatpush2.msra.mxu0 0.0
  %504 = vmatprep.subr.mxu0 0.0
  %505 = vmatpush2.msra.mxu0 0.0
  %506 = vmatprep.subr.mxu0 0.0
  %507 = vmatpush2.msra.mxu0 0.0
  %508 = vmatprep.subr.mxu0 0.0
  %509 = vmatpush2.msra.mxu0 0.0
  %510 = vmatprep.subr.mxu0 0.0
  %511 = vmatpush2.msra.mxu0 0.0
  %512 = vmatprep.subr.mxu0 0.0
  %513 = vmatpush2.msra.mxu0 0.0
  %514 = vmatprep.subr.mxu0 0.0
  %515 = vmatpush2.msra.mxu0 0.0
  %516 = vmatprep.subr.mxu0 0.0
  %517 = vmatpush2.msra.mxu0 0.0
  %518 = vmatprep.subr.mxu0 0.0
  %519 = vmatpush2.msra.mxu0 0.0
  %520 = vmatprep.subr.mxu0 0.0
  %521 = vmatpush2.msra.mxu0 0.0
  %522 = vmatprep.subr.mxu0 0.0
  %523 = vmatpush2.msra.mxu0 0.0
  %524 = vmatprep.subr.mxu0 0.0
  %525 = vmatpush2.msra.mxu0 0.0
  %526 = vmatprep.subr.mxu0 0.0
  %527 = vmatpush2.msra.mxu0 0.0
  %528 = vmatprep.subr.mxu0 0.0
  %529 = vmatpush2.msra.mxu0 0.0
  %530 = vmatprep.subr.mxu0 0.0
  %531 = vmatpush2.msra.mxu0 0.0
  %532 = vmatprep.subr.mxu0 0.0
  %533 = vmatpush2.msra.mxu0 0.0
  %534 = vmatprep.mubr.f32.mxu0 0.0
  %535 = vmatmul.mubr.f32.gmra.mxu0 %v468
  %v536 = vpop.f32.mrf.mxu0
  %v537 = vadd.f32 0.0, %v536
  %v538 = vpop.f32.mrf.mxu0
  %539 = vdwg.mxu0
  %v541 = vrot.slane %v537, 2
  %v543 = vadd.f32 %v216, %v541
  %v544 = vtanh.pop %v543
  %vm545 = vcmask 261126
  %546 = vst.msk [vmem:[#allocation2] sm:$0xc0] %vm545, %v544
  %v548 = vrot.slane %v544, 6
  %v549 = vsel %vm142, %v548, 0
  %551 = vmatprep.subr.mxu0 0.0
  %552 = vmatpush1.msra.mxu0 0.0
  %553 = vmatprep.subr.mxu0 0.0
  %554 = vmatpush1.msra.mxu0 0.0
  %555 = vmatprep.subr.mxu0 0.0
  %556 = vmatpush1.msra.mxu0 0.0
  %557 = vmatprep.subr.mxu0 0.0
  %558 = vmatpush1.msra.mxu0 0.0
  %559 = vmatprep.subr.mxu0 0.0
  %560 = vmatpush1.msra.mxu0 0.0
  %561 = vmatprep.subr.mxu0 0.0
  %562 = vmatpush1.msra.mxu0 0.0
  %563 = vmatprep.subr.mxu0 0.0
  %564 = vmatpush1.msra.mxu0 0.0
  %565 = vmatprep.subr.mxu0 0.0
  %566 = vmatpush1.msra.mxu0 0.0
  %567 = vmatprep.subr.mxu0 0.0
  %568 = vmatpush1.msra.mxu0 0.0
  %569 = vmatprep.subr.mxu0 0.0
  %570 = vmatpush1.msra.mxu0 0.0
  %571 = vmatprep.subr.mxu0 0.0
  %572 = vmatpush1.msra.mxu0 0.0
  %573 = vmatprep.subr.mxu0 0.0
  %574 = vmatpush1.msra.mxu0 0.0
  %575 = vmatprep.subr.mxu0 0.0
  %576 = vmatpush1.msra.mxu0 %v227
  %577 = vmatprep.subr.mxu0 0.0
  %578 = vmatpush1.msra.mxu0 %v226
  %579 = vmatprep.subr.mxu0 0.0
  %580 = vmatpush1.msra.mxu0 %v225
  %581 = vmatprep.subr.mxu0 0.0
  %582 = vmatpush1.msra.mxu0 %v224
  %583 = vmatprep.subr.mxu0 0.0
  %584 = vmatpush2.msra.mxu0 0.0
  %585 = vmatprep.subr.mxu0 0.0
  %586 = vmatpush2.msra.mxu0 0.0
  %587 = vmatprep.subr.mxu0 0.0
  %588 = vmatpush2.msra.mxu0 0.0
  %589 = vmatprep.subr.mxu0 0.0
  %590 = vmatpush2.msra.mxu0 0.0
  %591 = vmatprep.subr.mxu0 0.0
  %592 = vmatpush2.msra.mxu0 0.0
  %593 = vmatprep.subr.mxu0 0.0
  %594 = vmatpush2.msra.mxu0 0.0
  %595 = vmatprep.subr.mxu0 0.0
  %596 = vmatpush2.msra.mxu0 0.0
  %597 = vmatprep.subr.mxu0 0.0
  %598 = vmatpush2.msra.mxu0 0.0
  %599 = vmatprep.subr.mxu0 0.0
  %600 = vmatpush2.msra.mxu0 0.0
  %601 = vmatprep.subr.mxu0 0.0
  %602 = vmatpush2.msra.mxu0 0.0
  %603 = vmatprep.subr.mxu0 0.0
  %604 = vmatpush2.msra.mxu0 0.0
  %605 = vmatprep.subr.mxu0 0.0
  %606 = vmatpush2.msra.mxu0 0.0
  %607 = vmatprep.subr.mxu0 0.0
  %608 = vmatpush2.msra.mxu0 0.0
  %609 = vmatprep.subr.mxu0 0.0
  %610 = vmatpush2.msra.mxu0 0.0
  %611 = vmatprep.subr.mxu0 0.0
  %612 = vmatpush2.msra.mxu0 0.0
  %613 = vmatprep.subr.mxu0 0.0
  %614 = vmatpush2.msra.mxu0 0.0
  %615 = vmatprep.mubr.f32.mxu0 0.0
  %616 = vmatmul.mubr.f32.gmra.mxu0 %v549
  %v617 = vpop.f32.mrf.mxu0
  %v618 = vadd.f32 0.0, %v617
  %v619 = vpop.f32.mrf.mxu0
  %620 = vdwg.mxu0
  %v621 = vadd.f32 %v221, %v618
  %v622 = vtanh.pop %v621
  %623 = vst.msk [vmem:[#allocation2 + $0x8] sm:$0x3] %vm303, %v622
  %v625 = vsel %vm142, %v622, 0
  %627 = vmatprep.subr.mxu0 0.0
  %628 = vmatpush1.msra.mxu0 0.0
  %629 = vmatprep.subr.mxu0 0.0
  %630 = vmatpush1.msra.mxu0 0.0
  %631 = vmatprep.subr.mxu0 0.0
  %632 = vmatpush1.msra.mxu0 0.0
  %633 = vmatprep.subr.mxu0 0.0
  %634 = vmatpush1.msra.mxu0 0.0
  %635 = vmatprep.subr.mxu0 0.0
  %636 = vmatpush1.msra.mxu0 0.0
  %637 = vmatprep.subr.mxu0 0.0
  %638 = vmatpush1.msra.mxu0 0.0
  %639 = vmatprep.subr.mxu0 0.0
  %640 = vmatpush1.msra.mxu0 0.0
  %641 = vmatprep.subr.mxu0 0.0
  %642 = vmatpush1.msra.mxu0 0.0
  %643 = vmatprep.subr.mxu0 0.0
  %644 = vmatpush1.msra.mxu0 0.0
  %645 = vmatprep.subr.mxu0 0.0
  %646 = vmatpush1.msra.mxu0 0.0
  %647 = vmatprep.subr.mxu0 0.0
  %648 = vmatpush1.msra.mxu0 0.0
  %649 = vmatprep.subr.mxu0 0.0
  %650 = vmatpush1.msra.mxu0 0.0
  %651 = vmatprep.subr.mxu0 0.0
  %652 = vmatpush1.msra.mxu0 %v227
  %653 = vmatprep.subr.mxu0 0.0
  %654 = vmatpush1.msra.mxu0 %v226
  %655 = vmatprep.subr.mxu0 0.0
  %656 = vmatpush1.msra.mxu0 %v225
  %657 = vmatprep.subr.mxu0 0.0
  %658 = vmatpush1.msra.mxu0 %v224
  %659 = vmatprep.subr.mxu0 0.0
  %660 = vmatpush2.msra.mxu0 0.0
  %661 = vmatprep.subr.mxu0 0.0
  %662 = vmatpush2.msra.mxu0 0.0
  %663 = vmatprep.subr.mxu0 0.0
  %664 = vmatpush2.msra.mxu0 0.0
  %665 = vmatprep.subr.mxu0 0.0
  %666 = vmatpush2.msra.mxu0 0.0
  %667 = vmatprep.subr.mxu0 0.0
  %668 = vmatpush2.msra.mxu0 0.0
  %669 = vmatprep.subr.mxu0 0.0
  %670 = vmatpush2.msra.mxu0 0.0
  %671 = vmatprep.subr.mxu0 0.0
  %672 = vmatpush2.msra.mxu0 0.0
  %673 = vmatprep.subr.mxu0 0.0
  %674 = vmatpush2.msra.mxu0 0.0
  %675 = vmatprep.subr.mxu0 0.0
  %676 = vmatpush2.msra.mxu0 0.0
  %677 = vmatprep.subr.mxu0 0.0
  %678 = vmatpush2.msra.mxu0 0.0
  %679 = vmatprep.subr.mxu0 0.0
  %680 = vmatpush2.msra.mxu0 0.0
  %681 = vmatprep.subr.mxu0 0.0
  %682 = vmatpush2.msra.mxu0 0.0
  %683 = vmatprep.subr.mxu0 0.0
  %684 = vmatpush2.msra.mxu0 0.0
  %685 = vmatprep.subr.mxu0 0.0
  %686 = vmatpush2.msra.mxu0 0.0
  %687 = vmatprep.subr.mxu0 0.0
  %688 = vmatpush2.msra.mxu0 0.0
  %689 = vmatprep.subr.mxu0 0.0
  %690 = vmatpush2.msra.mxu0 0.0
  %691 = vmatprep.mubr.f32.mxu0 0.0
  %692 = vmatmul.mubr.f32.gmra.mxu0 %v625
  %v693 = vpop.f32.mrf.mxu0
  %v694 = vadd.f32 0.0, %v693
  %v695 = vpop.f32.mrf.mxu0
  %696 = vdwg.mxu0
  %v698 = vrot.slane %v694, 6
  %v700 = vadd.f32 %v221, %v698
  %v701 = vtanh.pop %v700
  %702 = vst.msk [vmem:[#allocation2 + $0x8] sm:$0xc] %vm383, %v701
  %v704 = vrot.slane %v701, 2
  %v705 = vsel %vm142, %v704, 0
  %707 = vmatprep.subr.mxu0 0.0
  %708 = vmatpush1.msra.mxu0 0.0
  %709 = vmatprep.subr.mxu0 0.0
  %710 = vmatpush1.msra.mxu0 0.0
  %711 = vmatprep.subr.mxu0 0.0
  %712 = vmatpush1.msra.mxu0 0.0
  %713 = vmatprep.subr.mxu0 0.0
  %714 = vmatpush1.msra.mxu0 0.0
  %715 = vmatprep.subr.mxu0 0.0
  %716 = vmatpush1.msra.mxu0 0.0
  %717 = vmatprep.subr.mxu0 0.0
  %718 = vmatpush1.msra.mxu0 0.0
  %719 = vmatprep.subr.mxu0 0.0
  %720 = vmatpush1.msra.mxu0 0.0
  %721 = vmatprep.subr.mxu0 0.0
  %722 = vmatpush1.msra.mxu0 0.0
  %723 = vmatprep.subr.mxu0 0.0
  %724 = vmatpush1.msra.mxu0 0.0
  %725 = vmatprep.subr.mxu0 0.0
  %726 = vmatpush1.msra.mxu0 0.0
  %727 = vmatprep.subr.mxu0 0.0
  %728 = vmatpush1.msra.mxu0 0.0
  %729 = vmatprep.subr.mxu0 0.0
  %730 = vmatpush1.msra.mxu0 0.0
  %731 = vmatprep.subr.mxu0 0.0
  %732 = vmatpush1.msra.mxu0 %v227
  %733 = vmatprep.subr.mxu0 0.0
  %734 = vmatpush1.msra.mxu0 %v226
  %735 = vmatprep.subr.mxu0 0.0
  %736 = vmatpush1.msra.mxu0 %v225
  %737 = vmatprep.subr.mxu0 0.0
  %738 = vmatpush1.msra.mxu0 %v224
  %739 = vmatprep.subr.mxu0 0.0
  %740 = vmatpush2.msra.mxu0 0.0
  %741 = vmatprep.subr.mxu0 0.0
  %742 = vmatpush2.msra.mxu0 0.0
  %743 = vmatprep.subr.mxu0 0.0
  %744 = vmatpush2.msra.mxu0 0.0
  %745 = vmatprep.subr.mxu0 0.0
  %746 = vmatpush2.msra.mxu0 0.0
  %747 = vmatprep.subr.mxu0 0.0
  %748 = vmatpush2.msra.mxu0 0.0
  %749 = vmatprep.subr.mxu0 0.0
  %750 = vmatpush2.msra.mxu0 0.0
  %751 = vmatprep.subr.mxu0 0.0
  %752 = vmatpush2.msra.mxu0 0.0
  %753 = vmatprep.subr.mxu0 0.0
  %754 = vmatpush2.msra.mxu0 0.0
  %755 = vmatprep.subr.mxu0 0.0
  %756 = vmatpush2.msra.mxu0 0.0
  %757 = vmatprep.subr.mxu0 0.0
  %758 = vmatpush2.msra.mxu0 0.0
  %759 = vmatprep.subr.mxu0 0.0
  %760 = vmatpush2.msra.mxu0 0.0
  %761 = vmatprep.subr.mxu0 0.0
  %762 = vmatpush2.msra.mxu0 0.0
  %763 = vmatprep.subr.mxu0 0.0
  %764 = vmatpush2.msra.mxu0 0.0
  %765 = vmatprep.subr.mxu0 0.0
  %766 = vmatpush2.msra.mxu0 0.0
  %767 = vmatprep.subr.mxu0 0.0
  %768 = vmatpush2.msra.mxu0 0.0
  %769 = vmatprep.subr.mxu0 0.0
  %770 = vmatpush2.msra.mxu0 0.0
  %771 = vmatprep.mubr.f32.mxu0 0.0
  %772 = vmatmul.mubr.f32.gmra.mxu0 %v705
  %v773 = vpop.f32.mrf.mxu0
  %v774 = vadd.f32 0.0, %v773
  %v775 = vpop.f32.mrf.mxu0
  %776 = vdwg.mxu0
  %v778 = vrot.slane %v774, 4
  %v780 = vadd.f32 %v221, %v778
  %v781 = vtanh.pop %v780
  %782 = vst.msk [vmem:[#allocation2 + $0x8] sm:$0x30] %vm464, %v781
  %v784 = vrot.slane %v781, 4
  %v785 = vsel %vm142, %v784, 0
  %787 = vmatprep.subr.mxu0 0.0
  %788 = vmatpush1.msra.mxu0 0.0
  %789 = vmatprep.subr.mxu0 0.0
  %790 = vmatpush1.msra.mxu0 0.0
  %791 = vmatprep.subr.mxu0 0.0
  %792 = vmatpush1.msra.mxu0 0.0
  %793 = vmatprep.subr.mxu0 0.0
  %794 = vmatpush1.msra.mxu0 0.0
  %795 = vmatprep.subr.mxu0 0.0
  %796 = vmatpush1.msra.mxu0 0.0
  %797 = vmatprep.subr.mxu0 0.0
  %798 = vmatpush1.msra.mxu0 0.0
  %799 = vmatprep.subr.mxu0 0.0
  %800 = vmatpush1.msra.mxu0 0.0
  %801 = vmatprep.subr.mxu0 0.0
  %802 = vmatpush1.msra.mxu0 0.0
  %803 = vmatprep.subr.mxu0 0.0
  %804 = vmatpush1.msra.mxu0 0.0
  %805 = vmatprep.subr.mxu0 0.0
  %806 = vmatpush1.msra.mxu0 0.0
  %807 = vmatprep.subr.mxu0 0.0
  %808 = vmatpush1.msra.mxu0 0.0
  %809 = vmatprep.subr.mxu0 0.0
  %810 = vmatpush1.msra.mxu0 0.0
  %811 = vmatprep.subr.mxu0 0.0
  %812 = vmatpush1.msra.mxu0 %v227
  %813 = vmatprep.subr.mxu0 0.0
  %814 = vmatpush1.msra.mxu0 %v226
  %815 = vmatprep.subr.mxu0 0.0
  %816 = vmatpush1.msra.mxu0 %v225
  %817 = vmatprep.subr.mxu0 0.0
  %818 = vmatpush1.msra.mxu0 %v224
  %819 = vmatprep.subr.mxu0 0.0
  %820 = vmatpush2.msra.mxu0 0.0
  %821 = vmatprep.subr.mxu0 0.0
  %822 = vmatpush2.msra.mxu0 0.0
  %823 = vmatprep.subr.mxu0 0.0
  %824 = vmatpush2.msra.mxu0 0.0
  %825 = vmatprep.subr.mxu0 0.0
  %826 = vmatpush2.msra.mxu0 0.0
  %827 = vmatprep.subr.mxu0 0.0
  %828 = vmatpush2.msra.mxu0 0.0
  %829 = vmatprep.subr.mxu0 0.0
  %830 = vmatpush2.msra.mxu0 0.0
  %831 = vmatprep.subr.mxu0 0.0
  %832 = vmatpush2.msra.mxu0 0.0
  %833 = vmatprep.subr.mxu0 0.0
  %834 = vmatpush2.msra.mxu0 0.0
  %835 = vmatprep.subr.mxu0 0.0
  %836 = vmatpush2.msra.mxu0 0.0
  %837 = vmatprep.subr.mxu0 0.0
  %838 = vmatpush2.msra.mxu0 0.0
  %839 = vmatprep.subr.mxu0 0.0
  %840 = vmatpush2.msra.mxu0 0.0
  %841 = vmatprep.subr.mxu0 0.0
  %842 = vmatpush2.msra.mxu0 0.0
  %843 = vmatprep.subr.mxu0 0.0
  %844 = vmatpush2.msra.mxu0 0.0
  %845 = vmatprep.subr.mxu0 0.0
  %846 = vmatpush2.msra.mxu0 0.0
  %847 = vmatprep.subr.mxu0 0.0
  %848 = vmatpush2.msra.mxu0 0.0
  %849 = vmatprep.subr.mxu0 0.0
  %850 = vmatpush2.msra.mxu0 0.0
  %851 = vmatprep.mubr.f32.mxu0 0.0
  %852 = vmatmul.mubr.f32.gmra.mxu0 %v785
  %v853 = vpop.f32.mrf.mxu0
  %v854 = vadd.f32 0.0, %v853
  %v855 = vpop.f32.mrf.mxu0
  %856 = vdwg.mxu0
  %v858 = vrot.slane %v854, 2
  %v860 = vadd.f32 %v221, %v858
  %v861 = vtanh.pop %v860
  %862 = vst.msk [vmem:[#allocation2 + $0x8] sm:$0xc0] %vm545, %v861
  %v863 = vld [vmem:[#allocation2] sm:$0xff]
  %v864 = vld [vmem:[#allocation2 + $0x8] sm:$0xff]
  %v865 = vld [vmem:[%s5] sm:$0xff]
  %v866 = vld [vmem:[%s5 + $0x8] sm:$0xff]
  %v867 = vld [vmem:[%s5 + $0x10] sm:$0xff]
  %v868 = vld [vmem:[%s5 + $0x18] sm:$0xff]
  %v869 = vld [vmem:[%s6] sm:$0x1]
  %v871 = vlaneseq
  %v872 = vshrl.u32 %v871, 7
  %v873 = vsub.s32 0, %v872
  %v874 = vrot.slane %v869, %v873
  %v877 = vsel %vm142, %v863, 0
  %v880 = vsel %vm142, %v864, 0
  %882 = vmatprep.subr.mxu0 0.0
  %883 = vmatpush1.msra.mxu0 0.0
  %884 = vmatprep.subr.mxu0 0.0
  %885 = vmatpush1.msra.mxu0 0.0
  %886 = vmatprep.subr.mxu0 0.0
  %887 = vmatpush1.msra.mxu0 0.0
  %888 = vmatprep.subr.mxu0 0.0
  %889 = vmatpush1.msra.mxu0 0.0
  %890 = vmatprep.subr.mxu0 0.0
  %891 = vmatpush1.msra.mxu0 0.0
  %892 = vmatprep.subr.mxu0 0.0
  %893 = vmatpush1.msra.mxu0 0.0
  %894 = vmatprep.subr.mxu0 0.0
  %895 = vmatpush1.msra.mxu0 0.0
  %896 = vmatprep.subr.mxu0 0.0
  %897 = vmatpush1.msra.mxu0 0.0
  %898 = vmatprep.subr.mxu0 0.0
  %899 = vmatpush1.msra.mxu0 0.0
  %900 = vmatprep.subr.mxu0 0.0
  %901 = vmatpush1.msra.mxu0 0.0
  %902 = vmatprep.subr.mxu0 0.0
  %903 = vmatpush1.msra.mxu0 0.0
  %904 = vmatprep.subr.mxu0 0.0
  %905 = vmatpush1.msra.mxu0 0.0
  %906 = vmatprep.subr.mxu0 0.0
  %907 = vmatpush1.msra.mxu0 %v868
  %908 = vmatprep.subr.mxu0 0.0
  %909 = vmatpush1.msra.mxu0 %v867
  %910 = vmatprep.subr.mxu0 0.0
  %911 = vmatpush1.msra.mxu0 %v866
  %912 = vmatprep.subr.mxu0 0.0
  %913 = vmatpush1.msra.mxu0 %v865
  %914 = vmatprep.subr.mxu0 0.0
  %915 = vmatpush2.msra.mxu0 0.0
  %916 = vmatprep.subr.mxu0 0.0
  %917 = vmatpush2.msra.mxu0 0.0
  %918 = vmatprep.subr.mxu0 0.0
  %919 = vmatpush2.msra.mxu0 0.0
  %920 = vmatprep.subr.mxu0 0.0
  %921 = vmatpush2.msra.mxu0 0.0
  %922 = vmatprep.subr.mxu0 0.0
  %923 = vmatpush2.msra.mxu0 0.0
  %924 = vmatprep.subr.mxu0 0.0
  %925 = vmatpush2.msra.mxu0 0.0
  %926 = vmatprep.subr.mxu0 0.0
  %927 = vmatpush2.msra.mxu0 0.0
  %928 = vmatprep.subr.mxu0 0.0
  %929 = vmatpush2.msra.mxu0 0.0
  %930 = vmatprep.subr.mxu0 0.0
  %931 = vmatpush2.msra.mxu0 0.0
  %932 = vmatprep.subr.mxu0 0.0
  %933 = vmatpush2.msra.mxu0 0.0
  %934 = vmatprep.subr.mxu0 0.0
  %935 = vmatpush2.msra.mxu0 0.0
  %936 = vmatprep.subr.mxu0 0.0
  %937 = vmatpush2.msra.mxu0 0.0
  %938 = vmatprep.subr.mxu0 0.0
  %939 = vmatpush2.msra.mxu0 0.0
  %940 = vmatprep.subr.mxu0 0.0
  %941 = vmatpush2.msra.mxu0 0.0
  %942 = vmatprep.subr.mxu0 0.0
  %943 = vmatpush2.msra.mxu0 0.0
  %944 = vmatprep.subr.mxu0 0.0
  %945 = vmatpush2.msra.mxu0 0.0
  %946 = vmatprep.mubr.f32.mxu0 0.0
  %947 = vmatmul.mubr.f32.gmra.mxu0 %v877
  %v948 = vpop.f32.mrf.mxu0
  %v949 = vadd.f32 %v874, %v948
  %v950 = vpop.f32.mrf.mxu0
  %951 = vmatprep.mubr.f32.mxu0 0.0
  %952 = vmatmul.mubr.f32.gmra.mxu0 %v880
  %v953 = vpop.f32.mrf.mxu0
  %v954 = vadd.f32 %v874, %v953
  %v955 = vpop.f32.mrf.mxu0
  %956 = vdwg.mxu0
  %vm957 = vcmask 64512
  %v958 = vsel %vm957, %v949, -inf
  %959 = vmax.xlane.f32.xlu0 %v958
  %v960 = vpop.xlane.xlu0 %959
  %v961 = vsel %vm957, %v954, -inf
  %962 = vmax.xlane.f32.xlu0 %v961
  %v963 = vpop.xlane.xlu0 %962
  %v964 = vsub.f32 %v949, %v960
  %v965 = vsub.f32 %v954, %v963
  %v966 = vmul.f32 %v964, 1.442695
  %v967 = vpow.pop %v966
  %v968 = vmul.f32 %v965, 1.442695
  %v969 = vpow.pop %v968
  %v970 = vsel %vm957, %v967, 0.0
  %971 = vadd.xlane.f32.xlu0 %v970
  %v972 = vpop.xlane.xlu0 %971
  %v973 = vsel %vm957, %v969, 0.0
  %974 = vadd.xlane.f32.xlu0 %v973
  %v975 = vpop.xlane.xlu0 %974
  %v976 = vlog2.pop %v972
  %v977 = vmul.f32 %v976, 0.6931472
  %v978 = vlog2.pop %v975
  %v979 = vmul.f32 %v978, 0.6931472
  %v980 = vsub.f32 %v964, %v977
  %v981 = vsub.f32 %v965, %v979
  %982 = vst.msk [vmem:[%s7] sm:$0xff] %vm957, %v980
  %983 = vst.msk [vmem:[%s7 + $0x8] sm:$0xff] %vm957, %v981
  // Predicated region
  $region30: #{net_forward.1} parent=0 // pred_check
    _
  $region31: #{net_forward.1} parent=0 // pred_check_branch
    %985 = sbr.rel (0) target = $region33
  $region32: #{net_forward.1} parent=0 // pred_region
    _
  $region33: #{net_forward.1} parent=0 // pred_fallthru
    _
  // Predicated region
  $region34: #{net_forward.1} parent=0 // pred_check
    _
  $region35: #{net_forward.1} parent=0 // pred_check_branch
    %987 = sbr.rel (0) target = $region37
  $region36: #{net_forward.1} parent=0 // pred_region
    _
  $region37: #{net_forward.1} parent=0 // pred_fallthru
    _

</llo_original>
